<compile_context>
chip_gen: v5e
topology: v5e:2x2
jax: 0.10.0
libtpu: 0.0.40
codegen_flags: <defaults>
</compile_context>

<pallas_src>
import jax
import jax.numpy as jnp
from jax.experimental import pallas as pl
from jax.experimental.pallas import tpu as pltpu

# ----------------------------- hyper-parameters ------------------------------
VOCAB = 64          # input_size  (embedding vocabulary)
HIDDEN = 32         # hidden_size
OUTPUT = 64         # output_size
NUM_LAYERS = 2      # num_layers


# --------------------------------- kernel ------------------------------------
def lstm_stack_kernel(tokens_ref,     # SMEM scalar-prefetch: (T,) token indices
                      emb_ref,        # (V, 1, H)        full embedding table (VMEM resident)
                      wbig_ref,       # ((L+1)H, L*4H)   fused [x->l0 | h_l->W_hh_l] block
                      wih_ref,        # (L, H, 4H)       W_ih^T per layer (layer 0 unused here)
                      b_ref,          # (L, 1, 4H)       b_ih + b_hh per layer
                      h0_ref,         # (L, 1, H)        initial hidden states
                      c0_ref,         # (L, 1, H)        initial cell states
                      wdec_ref,       # (H, O_pad)       decoder weight^T (zero-padded)
                      bdec_ref,       # (1, O_pad)       decoder bias (zero-padded)
                      logits_ref,     # (1, 1, O_pad)    per-step logits block
                      states_ref,     # (1, 2*L*H)       packed final [h | c]
                      h_sc,           # VMEM scratch (L, 1, H) carried hidden
                      c_sc):          # VMEM scratch (L, 1, H) carried cell
    L, _, H = h0_ref.shape
    H4 = 4 * H
    t = pl.program_id(0)

    # Load initial recurrent state into the VMEM-resident carry once.
    @pl.when(t == 0)
    def _init():
        h_sc[...] = h0_ref[...]
        c_sc[...] = c0_ref[...]

    # In-VMEM embedding gather (dynamic leading-dim index, no per-step DMA).
    tok = tokens_ref[t]
    x = emb_ref[tok]                                           # (1, H)

    # One MXU push computes layer-0 gates fully plus every layer's W_hh partial.
    xh_all = jnp.concatenate([x] + [h_sc[l] for l in range(L)], axis=-1)   # (1, (L+1)H)
    big = jnp.dot(xh_all, wbig_ref[...],
                  preferred_element_type=jnp.float32)          # (1, L*4H)

    def cell(gates, c_prev):
        # sigmoid(x) = 0.5*tanh(0.5*x) + 0.5 : EUP tanh + FMA, no divide in the chain.
        sig = 0.5 * jnp.tanh(0.5 * gates) + 0.5
        th = jnp.tanh(gates)
        i_g = sig[:, 0 * H:1 * H]
        f_g = sig[:, 1 * H:2 * H]
        g_g = th[:, 2 * H:3 * H]
        o_g = sig[:, 3 * H:4 * H]
        c_new = f_g * c_prev + i_g * g_g
        h_new = o_g * jnp.tanh(c_new)
        return h_new, c_new

    x_l = x
    for l in range(L):                                         # static unroll, L small
        partial = big[:, l * H4:(l + 1) * H4] + b_ref[l]       # (1, 4H)
        if l == 0:
            gates = partial                                    # already includes x@W_ih0
        else:
            gates = partial + jnp.dot(x_l, wih_ref[l],
                                      preferred_element_type=jnp.float32)
        h_new, c_new = cell(gates, c_sc[l])
        h_sc[l] = h_new
        c_sc[l] = c_new
        x_l = h_new

    # Per-step decoder projection (lane-dense padded store).
    logits_ref[0] = (jnp.dot(x_l, wdec_ref[...],
                             preferred_element_type=jnp.float32)
                     + bdec_ref[...])

    # Final recurrent state: one lane-dense 128-wide store at the last step.
    @pl.when(t == pl.num_programs(0) - 1)
    def _final():
        states_ref[...] = jnp.concatenate(
            [h_sc[l] for l in range(L)] + [c_sc[l] for l in range(L)], axis=-1)


# -------------------------------- wrapper -------------------------------------
def pack_params(raw):
    """Fuse W_ih0 / all W_hh into one big block, keep W_ih per layer, pad decoder."""
    emb, w_ih_t, w_hh_t, b, w_dec_t, b_dec = raw
    L, H, H4 = w_ih_t.shape
    # Rows: [x | h_prev(0) | ... | h_prev(L-1)]; cols: [gates layer 0 | ... | layer L-1].
    w_big = jnp.zeros(((L + 1) * H, L * H4), jnp.float32)
    w_big = w_big.at[0:H, 0:H4].set(w_ih_t[0])
    for l in range(L):
        w_big = w_big.at[(1 + l) * H:(2 + l) * H, l * H4:(l + 1) * H4].set(w_hh_t[l])
    O = w_dec_t.shape[-1]
    O_pad = max(128, ((O + 127) // 128) * 128)
    w_dec_pad = jnp.zeros((H, O_pad), jnp.float32).at[:, :O].set(w_dec_t)
    b_dec_pad = jnp.zeros((1, O_pad), jnp.float32).at[:, :O].set(b_dec)
    return emb, w_big, w_ih_t, b, w_dec_pad, b_dec_pad, O


def lstm_decode(tokens, h0, c0, packed):
    """tokens: int32[T]; h0, c0: (L, 1, H).  Returns (logits[T, O], (h, c))."""
    emb, w_big, w_ih_t, b, w_dec_pad, b_dec_pad, O = packed
    L, _, H = h0.shape
    V = emb.shape[0]
    T = tokens.shape[0]
    H4 = 4 * H
    O_pad = w_dec_pad.shape[-1]

    flops_per_step = (2 * ((L + 1) * H) * (L * H4)
                      + 2 * max(L - 1, 0) * H * H4
                      + 2 * H * O_pad)
    cost = pl.CostEstimate(
        flops=T * flops_per_step,
        transcendentals=T * L * (2 * H4 + H),
        bytes_accessed=4 * (emb.size + w_big.size + w_ih_t.size + b.size
                            + h0.size + c0.size + w_dec_pad.size + b_dec_pad.size
                            + 2 * L * H) + T * 4 * (H + O_pad),
    )

    grid_spec = pltpu.PrefetchScalarGridSpec(
        num_scalar_prefetch=1,              # tokens -> SMEM, read in-kernel per step
        grid=(T,),                          # in-kernel time loop
        in_specs=[
            pl.BlockSpec((V, 1, H), lambda t, toks: (0, 0, 0)),            # emb table
            pl.BlockSpec(((L + 1) * H, L * H4), lambda t, toks: (0, 0)),   # fused W
            pl.BlockSpec((L, H, H4), lambda t, toks: (0, 0, 0)),           # W_ih^T
            pl.BlockSpec((L, 1, H4), lambda t, toks: (0, 0, 0)),           # bias
            pl.BlockSpec((L, 1, H), lambda t, toks: (0, 0, 0)),            # h0
            pl.BlockSpec((L, 1, H), lambda t, toks: (0, 0, 0)),            # c0
            pl.BlockSpec((H, O_pad), lambda t, toks: (0, 0)),              # decoder W^T
            pl.BlockSpec((1, O_pad), lambda t, toks: (0, 0)),              # decoder b
        ],
        out_specs=[
            pl.BlockSpec((1, 1, O_pad), lambda t, toks: (t, 0, 0)),        # per-step logits
            pl.BlockSpec((1, 2 * L * H), lambda t, toks: (0, 0)),          # packed final h|c
        ],
        scratch_shapes=[
            pltpu.VMEM((L, 1, H), jnp.float32),                            # carried h
            pltpu.VMEM((L, 1, H), jnp.float32),                            # carried c
        ],
    )

    logits_pad, states = pl.pallas_call(
        lstm_stack_kernel,
        grid_spec=grid_spec,
        out_shape=(
            jax.ShapeDtypeStruct((T, 1, O_pad), jnp.float32),
            jax.ShapeDtypeStruct((1, 2 * L * H), jnp.float32),
        ),
        compiler_params=pltpu.CompilerParams(
            dimension_semantics=("arbitrary",)),   # serial h/c carry across steps
        cost_estimate=cost,
    )(tokens, emb, w_big, w_ih_t, b, h0, c0, w_dec_pad, b_dec_pad)

    logits = logits_pad.reshape(T, O_pad)[:, :O]
    states_2d = states.reshape(2 * L, H)
    h_out = states_2d[:L][:, None, :]
    c_out = states_2d[L:][:, None, :]
    return logits, (h_out, c_out)


def lstm_forward(token_idx, h0, c0, packed):
    """Single-step forward, exactly the PyTorch module semantics."""
    logits, (h, c) = lstm_decode(token_idx.reshape(1), h0, c0, packed)
    return logits, (h, c)


# --------------------------- pure-JAX reference --------------------------------
def lstm_decode_ref(tokens, h0, c0, raw):
    emb, w_ih_t, w_hh_t, b, w_dec_t, b_dec = raw
    L, _, H = h0.shape
    h, c = h0, c0
    outs = []
    for t in range(tokens.shape[0]):
        x = emb[tokens[t], 0][None, :]
        hs, cs = [], []
        for l in range(L):
            gates = x @ w_ih_t[l] + h[l] @ w_hh_t[l] + b[l]
            i_g = jax.nn.sigmoid(gates[:, 0 * H:1 * H])
            f_g = jax.nn.sigmoid(gates[:, 1 * H:2 * H])
            g_g = jnp.tanh(gates[:, 2 * H:3 * H])
            o_g = jax.nn.sigmoid(gates[:, 3 * H:4 * H])
            c_new = f_g * c[l] + i_g * g_g
            h_new = o_g * jnp.tanh(c_new)
            hs.append(h_new)
            cs.append(c_new)
            x = h_new
        h = jnp.stack(hs)
        c = jnp.stack(cs)
        outs.append(x @ w_dec_t + b_dec)
    return jnp.concatenate(outs, axis=0), (h, c)


# ------------------------------ parameter init ---------------------------------
def init_params(key, vocab, hidden, output, num_layers):
    ks = jax.random.split(key, 8)
    scale = 1.0 / jnp.sqrt(hidden)
    emb = jax.random.normal(ks[0], (vocab, 1, hidden), jnp.float32)
    # PyTorch stores W_ih (4H, in), W_hh (4H, H); pre-transposed to (H, 4H) here.
    w_ih_t = jax.random.uniform(ks[1], (num_layers, hidden, 4 * hidden),
                                jnp.float32, -scale, scale)
    w_hh_t = jax.random.uniform(ks[2], (num_layers, hidden, 4 * hidden),
                                jnp.float32, -scale, scale)
    b_ih = jax.random.uniform(ks[3], (num_layers, 1, 4 * hidden),
                              jnp.float32, -scale, scale)
    b_hh = jax.random.uniform(ks[4], (num_layers, 1, 4 * hidden),
                              jnp.float32, -scale, scale)
    b = b_ih + b_hh
    w_dec_t = jax.random.uniform(ks[5], (hidden, output),
                                 jnp.float32, -scale, scale)
    b_dec = jax.random.uniform(ks[6], (1, output), jnp.float32, -scale, scale)
    return emb, w_ih_t, w_hh_t, b, w_dec_t, b_dec


# ----------------------------------- main ---------------------------------------
if __name__ == "__main__":
    key = jax.random.PRNGKey(0)
    raw_params = init_params(key, VOCAB, HIDDEN, OUTPUT, NUM_LAYERS)
    packed_params = pack_params(raw_params)

    h0 = jnp.zeros((NUM_LAYERS, 1, HIDDEN), jnp.float32)
    c0 = jnp.zeros((NUM_LAYERS, 1, HIDDEN), jnp.float32)

    # ---- single step: exact module forward semantics (seq_len = 1) ----
    token_idx = jnp.array([7], dtype=jnp.int32)
    logits, (h_new, c_new) = lstm_forward(token_idx, h0, c0, packed_params)
    jax.block_until_ready((logits, h_new, c_new))

    logits_r, (h_r, c_r) = lstm_decode_ref(token_idx, h0, c0, raw_params)
    assert logits.shape == (1, OUTPUT)
    assert h_new.shape == (NUM_LAYERS, 1, HIDDEN)
    assert c_new.shape == (NUM_LAYERS, 1, HIDDEN)
    assert jnp.allclose(logits, logits_r, rtol=1e-4, atol=1e-5)
    assert jnp.allclose(h_new, h_r, rtol=1e-4, atol=1e-5)
    assert jnp.allclose(c_new, c_r, rtol=1e-4, atol=1e-5)

    # ---- multi-step decode: in-kernel time loop (weights stay VMEM-resident) ----
    T = 8
    tokens = jax.random.randint(jax.random.PRNGKey(1), (T,), 0, VOCAB,
                                dtype=jnp.int32)
    logits_seq, (h_T, c_T) = lstm_decode(tokens, h0, c0, packed_params)
    jax.block_until_ready((logits_seq, h_T, c_T))

    logits_seq_r, (h_T_r, c_T_r) = lstm_decode_ref(tokens, h0, c0, raw_params)
    assert logits_seq.shape == (T, OUTPUT)
    assert jnp.allclose(logits_seq, logits_seq_r, rtol=1e-4, atol=1e-5)
    assert jnp.allclose(h_T, h_T_r, rtol=1e-4, atol=1e-5)
    assert jnp.allclose(c_T, c_T_r, rtol=1e-4, atol=1e-5)

    print("KERNEL_OK")
</pallas_src>

<mosaic_0001>
module attributes {stable_mosaic.version = 11 : i64} {
  func.func @lstm_stack_kernel(%arg0: i32, %arg1: memref<1xi32, #tpu.memory_space<smem>>, %arg2: memref<64x1x32xf32, #tpu.memory_space<vmem>>, %arg3: memref<96x256xf32, #tpu.memory_space<vmem>>, %arg4: memref<2x32x128xf32, #tpu.memory_space<vmem>>, %arg5: memref<2x1x128xf32, #tpu.memory_space<vmem>>, %arg6: memref<2x1x32xf32, #tpu.memory_space<vmem>>, %arg7: memref<2x1x32xf32, #tpu.memory_space<vmem>>, %arg8: memref<32x128xf32, #tpu.memory_space<vmem>>, %arg9: memref<1x128xf32, #tpu.memory_space<vmem>>, %arg10: memref<1x1x128xf32, #tpu.memory_space<vmem>>, %arg11: memref<1x128xf32, #tpu.memory_space<vmem>>, %arg12: memref<2x1x32xf32, #tpu.memory_space<vmem>>, %arg13: memref<2x1x32xf32, #tpu.memory_space<vmem>>) attributes {dimension_semantics = [#tpu.dimension_semantics<arbitrary>], iteration_bounds = array<i64: 1>, scalar_prefetch = 1 : i64, scratch_operands = 2 : i64, tpu.core_type = #tpu.core_type<tc>, window_params = [{pipeline_mode = #tpu.pipeline_mode<synchronous>, transform_indices = @transform_0, window_bounds = array<i64: 64, 1, 32>}, {pipeline_mode = #tpu.pipeline_mode<synchronous>, transform_indices = @transform_1, window_bounds = array<i64: 96, 256>}, {pipeline_mode = #tpu.pipeline_mode<synchronous>, transform_indices = @transform_2, window_bounds = array<i64: 2, 32, 128>}, {pipeline_mode = #tpu.pipeline_mode<synchronous>, transform_indices = @transform_3, window_bounds = array<i64: 2, 1, 128>}, {pipeline_mode = #tpu.pipeline_mode<synchronous>, transform_indices = @transform_4, window_bounds = array<i64: 2, 1, 32>}, {pipeline_mode = #tpu.pipeline_mode<synchronous>, transform_indices = @transform_5, window_bounds = array<i64: 2, 1, 32>}, {pipeline_mode = #tpu.pipeline_mode<synchronous>, transform_indices = @transform_6, window_bounds = array<i64: 32, 128>}, {pipeline_mode = #tpu.pipeline_mode<synchronous>, transform_indices = @transform_7, window_bounds = array<i64: 1, 128>}, {transform_indices = @transform_8, window_bounds = array<i64: 1, 1, 128>}, {pipeline_mode = #tpu.pipeline_mode<synchronous>, transform_indices = @transform_9, window_bounds = array<i64: 1, 128>}]} {
    %c0_i32 = arith.constant 0 : i32
    %0 = arith.cmpi eq, %arg0, %c0_i32 : i32
    %1 = arith.extui %0 : i1 to i32
    %c0_i32_0 = arith.constant 0 : i32
    %2 = arith.cmpi ne, %1, %c0_i32_0 : i32
    scf.if %2 {
      %c0_53 = arith.constant 0 : index
      %c0_54 = arith.constant 0 : index
      %c0_55 = arith.constant 0 : index
      %87 = vector.load %arg6[%c0_53, %c0_54, %c0_55] : memref<2x1x32xf32, #tpu.memory_space<vmem>>, vector<2x1x32xf32>
      %c0_56 = arith.constant 0 : index
      %c0_57 = arith.constant 0 : index
      %c0_58 = arith.constant 0 : index
      %88 = vector.load %arg12[%c0_56, %c0_57, %c0_58] : memref<2x1x32xf32, #tpu.memory_space<vmem>>, vector<2x1x32xf32>
      tpu.vector_store %arg12[%c0_56, %c0_57, %c0_58], %87 {strides = array<i32>} : memref<2x1x32xf32, #tpu.memory_space<vmem>>, vector<2x1x32xf32>,
      %c0_59 = arith.constant 0 : index
      %c0_60 = arith.constant 0 : index
      %c0_61 = arith.constant 0 : index
      %89 = vector.load %arg7[%c0_59, %c0_60, %c0_61] : memref<2x1x32xf32, #tpu.memory_space<vmem>>, vector<2x1x32xf32>
      %c0_62 = arith.constant 0 : index
      %c0_63 = arith.constant 0 : index
      %c0_64 = arith.constant 0 : index
      %90 = vector.load %arg13[%c0_62, %c0_63, %c0_64] : memref<2x1x32xf32, #tpu.memory_space<vmem>>, vector<2x1x32xf32>
      tpu.vector_store %arg13[%c0_62, %c0_63, %c0_64], %89 {strides = array<i32>} : memref<2x1x32xf32, #tpu.memory_space<vmem>>, vector<2x1x32xf32>,
    } else {
    }
    %3 = arith.index_cast %arg0 : i32 to index
    %4 = memref.load %arg1[%3] : memref<1xi32, #tpu.memory_space<smem>>
    %5 = arith.index_cast %4 : i32 to index
    %c0 = arith.constant 0 : index
    %c0_1 = arith.constant 0 : index
    %6 = vector.load %arg2[%5, %c0, %c0_1] : memref<64x1x32xf32, #tpu.memory_space<vmem>>, vector<1x1x32xf32>
    %7 = vector.shape_cast %6 : vector<1x1x32xf32> to vector<1x32xf32>
    %c0_2 = arith.constant 0 : index
    %c0_3 = arith.constant 0 : index
    %c0_4 = arith.constant 0 : index
    %8 = vector.load %arg12[%c0_2, %c0_3, %c0_4] : memref<2x1x32xf32, #tpu.memory_space<vmem>>, vector<1x1x32xf32>
    %9 = vector.shape_cast %8 : vector<1x1x32xf32> to vector<1x32xf32>
    %c1 = arith.constant 1 : index
    %c0_5 = arith.constant 0 : index
    %c0_6 = arith.constant 0 : index
    %10 = vector.load %arg12[%c1, %c0_5, %c0_6] : memref<2x1x32xf32, #tpu.memory_space<vmem>>, vector<1x1x32xf32>
    %11 = vector.shape_cast %10 : vector<1x1x32xf32> to vector<1x32xf32>
    %12 = tpu.concatenate %7, %9, %11 in 1 : vector<1x32xf32>, vector<1x32xf32>, vector<1x32xf32> -> vector<1x96xf32>
    %c0_7 = arith.constant 0 : index
    %c0_8 = arith.constant 0 : index
    %13 = vector.load %arg3[%c0_7, %c0_8] : memref<96x256xf32, #tpu.memory_space<vmem>>, vector<96x256xf32>
    %cst = arith.constant dense<0.000000e+00> : vector<1x256xf32>
    %14 = tpu.matmul %12, %13, %cst {dimension_numbers = #tpu.dot_dimension_numbers<[1], [0], [0], [1], [0, 0, 1, 1], [], []>} : vector<1x96xf32>, vector<96x256xf32>, vector<1x256xf32> -> vector<1x256xf32>
    %15 = vector.extract_strided_slice %14 {offsets = [0, 0], sizes = [1, 128], strides = [1, 1]} : vector<1x256xf32> to vector<1x128xf32>
    %c0_9 = arith.constant 0 : index
    %c0_10 = arith.constant 0 : index
    %c0_11 = arith.constant 0 : index
    %16 = vector.load %arg5[%c0_9, %c0_10, %c0_11] : memref<2x1x128xf32, #tpu.memory_space<vmem>>, vector<1x1x128xf32>
    %17 = vector.shape_cast %16 : vector<1x1x128xf32> to vector<1x128xf32>
    %18 = arith.addf %15, %17 : vector<1x128xf32>
    %c0_12 = arith.constant 0 : index
    %c0_13 = arith.constant 0 : index
    %c0_14 = arith.constant 0 : index
    %19 = vector.load %arg13[%c0_12, %c0_13, %c0_14] : memref<2x1x32xf32, #tpu.memory_space<vmem>>, vector<1x1x32xf32>
    %20 = vector.shape_cast %19 : vector<1x1x32xf32> to vector<1x32xf32>
    %cst_15 = arith.constant 5.000000e-01 : f32
    %21 = vector.broadcast %cst_15 : f32 to vector<1x128xf32>
    %22 = arith.mulf %21, %18 : vector<1x128xf32>
    %23 = math.tanh %22 : vector<1x128xf32>
    %cst_16 = arith.constant 5.000000e-01 : f32
    %24 = vector.broadcast %cst_16 : f32 to vector<1x128xf32>
    %25 = arith.mulf %24, %23 : vector<1x128xf32>
    %cst_17 = arith.constant 5.000000e-01 : f32
    %26 = vector.broadcast %cst_17 : f32 to vector<1x128xf32>
    %27 = arith.addf %25, %26 : vector<1x128xf32>
    %28 = math.tanh %18 : vector<1x128xf32>
    %29 = vector.extract_strided_slice %27 {offsets = [0, 0], sizes = [1, 32], strides = [1, 1]} : vector<1x128xf32> to vector<1x32xf32>
    %30 = vector.extract_strided_slice %27 {offsets = [0, 32], sizes = [1, 32], strides = [1, 1]} : vector<1x128xf32> to vector<1x32xf32>
    %31 = vector.extract_strided_slice %28 {offsets = [0, 64], sizes = [1, 32], strides = [1, 1]} : vector<1x128xf32> to vector<1x32xf32>
    %32 = vector.extract_strided_slice %27 {offsets = [0, 96], sizes = [1, 32], strides = [1, 1]} : vector<1x128xf32> to vector<1x32xf32>
    %33 = arith.mulf %30, %20 : vector<1x32xf32>
    %34 = arith.mulf %29, %31 : vector<1x32xf32>
    %35 = arith.addf %33, %34 : vector<1x32xf32>
    %36 = math.tanh %35 : vector<1x32xf32>
    %37 = arith.mulf %32, %36 : vector<1x32xf32>
    %c0_18 = arith.constant 0 : index
    %c0_19 = arith.constant 0 : index
    %c0_20 = arith.constant 0 : index
    %38 = vector.load %arg12[%c0_18, %c0_19, %c0_20] : memref<2x1x32xf32, #tpu.memory_space<vmem>>, vector<1x1x32xf32>
    %39 = vector.shape_cast %38 : vector<1x1x32xf32> to vector<1x32xf32>
    %40 = vector.shape_cast %37 : vector<1x32xf32> to vector<1x1x32xf32>
    tpu.vector_store %arg12[%c0_18, %c0_19, %c0_20], %40 {strides = array<i32>} : memref<2x1x32xf32, #tpu.memory_space<vmem>>, vector<1x1x32xf32>,
    %c0_21 = arith.constant 0 : index
    %c0_22 = arith.constant 0 : index
    %c0_23 = arith.constant 0 : index
    %41 = vector.load %arg13[%c0_21, %c0_22, %c0_23] : memref<2x1x32xf32, #tpu.memory_space<vmem>>, vector<1x1x32xf32>
    %42 = vector.shape_cast %41 : vector<1x1x32xf32> to vector<1x32xf32>
    %43 = vector.shape_cast %35 : vector<1x32xf32> to vector<1x1x32xf32>
    tpu.vector_store %arg13[%c0_21, %c0_22, %c0_23], %43 {strides = array<i32>} : memref<2x1x32xf32, #tpu.memory_space<vmem>>, vector<1x1x32xf32>,
    %44 = vector.extract_strided_slice %14 {offsets = [0, 128], sizes = [1, 128], strides = [1, 1]} : vector<1x256xf32> to vector<1x128xf32>
    %c1_24 = arith.constant 1 : index
    %c0_25 = arith.constant 0 : index
    %c0_26 = arith.constant 0 : index
    %45 = vector.load %arg5[%c1_24, %c0_25, %c0_26] : memref<2x1x128xf32, #tpu.memory_space<vmem>>, vector<1x1x128xf32>
    %46 = vector.shape_cast %45 : vector<1x1x128xf32> to vector<1x128xf32>
    %47 = arith.addf %44, %46 : vector<1x128xf32>
    %c1_27 = arith.constant 1 : index
    %c0_28 = arith.constant 0 : index
    %c0_29 = arith.constant 0 : index
    %48 = vector.load %arg4[%c1_27, %c0_28, %c0_29] : memref<2x32x128xf32, #tpu.memory_space<vmem>>, vector<1x32x128xf32>
    %49 = vector.shape_cast %48 : vector<1x32x128xf32> to vector<32x128xf32>
    %cst_30 = arith.constant dense<0.000000e+00> : vector<1x128xf32>
    %50 = tpu.matmul %37, %49, %cst_30 {dimension_numbers = #tpu.dot_dimension_numbers<[1], [0], [0], [1], [0, 0, 1, 1], [], []>} : vector<1x32xf32>, vector<32x128xf32>, vector<1x128xf32> -> vector<1x128xf32>
    %51 = arith.addf %47, %50 : vector<1x128xf32>
    %c1_31 = arith.constant 1 : index
    %c0_32 = arith.constant 0 : index
    %c0_33 = arith.constant 0 : index
    %52 = vector.load %arg13[%c1_31, %c0_32, %c0_33] : memref<2x1x32xf32, #tpu.memory_space<vmem>>, vector<1x1x32xf32>
    %53 = vector.shape_cast %52 : vector<1x1x32xf32> to vector<1x32xf32>
    %cst_34 = arith.constant 5.000000e-01 : f32
    %54 = vector.broadcast %cst_34 : f32 to vector<1x128xf32>
    %55 = arith.mulf %54, %51 : vector<1x128xf32>
    %56 = math.tanh %55 : vector<1x128xf32>
    %cst_35 = arith.constant 5.000000e-01 : f32
    %57 = vector.broadcast %cst_35 : f32 to vector<1x128xf32>
    %58 = arith.mulf %57, %56 : vector<1x128xf32>
    %cst_36 = arith.constant 5.000000e-01 : f32
    %59 = vector.broadcast %cst_36 : f32 to vector<1x128xf32>
    %60 = arith.addf %58, %59 : vector<1x128xf32>
    %61 = math.tanh %51 : vector<1x128xf32>
    %62 = vector.extract_strided_slice %60 {offsets = [0, 0], sizes = [1, 32], strides = [1, 1]} : vector<1x128xf32> to vector<1x32xf32>
    %63 = vector.extract_strided_slice %60 {offsets = [0, 32], sizes = [1, 32], strides = [1, 1]} : vector<1x128xf32> to vector<1x32xf32>
    %64 = vector.extract_strided_slice %61 {offsets = [0, 64], sizes = [1, 32], strides = [1, 1]} : vector<1x128xf32> to vector<1x32xf32>
    %65 = vector.extract_strided_slice %60 {offsets = [0, 96], sizes = [1, 32], strides = [1, 1]} : vector<1x128xf32> to vector<1x32xf32>
    %66 = arith.mulf %63, %53 : vector<1x32xf32>
    %67 = arith.mulf %62, %64 : vector<1x32xf32>
    %68 = arith.addf %66, %67 : vector<1x32xf32>
    %69 = math.tanh %68 : vector<1x32xf32>
    %70 = arith.mulf %65, %69 : vector<1x32xf32>
    %c1_37 = arith.constant 1 : index
    %c0_38 = arith.constant 0 : index
    %c0_39 = arith.constant 0 : index
    %71 = vector.load %arg12[%c1_37, %c0_38, %c0_39] : memref<2x1x32xf32, #tpu.memory_space<vmem>>, vector<1x1x32xf32>
    %72 = vector.shape_cast %71 : vector<1x1x32xf32> to vector<1x32xf32>
    %73 = vector.shape_cast %70 : vector<1x32xf32> to vector<1x1x32xf32>
    tpu.vector_store %arg12[%c1_37, %c0_38, %c0_39], %73 {strides = array<i32>} : memref<2x1x32xf32, #tpu.memory_space<vmem>>, vector<1x1x32xf32>,
    %c1_40 = arith.constant 1 : index
    %c0_41 = arith.constant 0 : index
    %c0_42 = arith.constant 0 : index
    %74 = vector.load %arg13[%c1_40, %c0_41, %c0_42] : memref<2x1x32xf32, #tpu.memory_space<vmem>>, vector<1x1x32xf32>
    %75 = vector.shape_cast %74 : vector<1x1x32xf32> to vector<1x32xf32>
    %76 = vector.shape_cast %68 : vector<1x32xf32> to vector<1x1x32xf32>
    tpu.vector_store %arg13[%c1_40, %c0_41, %c0_42], %76 {strides = array<i32>} : memref<2x1x32xf32, #tpu.memory_space<vmem>>, vector<1x1x32xf32>,
    %c0_43 = arith.constant 0 : index
    %c0_44 = arith.constant 0 : index
    %77 = vector.load %arg8[%c0_43, %c0_44] : memref<32x128xf32, #tpu.memory_space<vmem>>, vector<32x128xf32>
    %cst_45 = arith.constant dense<0.000000e+00> : vector<1x128xf32>
    %78 = tpu.matmul %70, %77, %cst_45 {dimension_numbers = #tpu.dot_dimension_numbers<[1], [0], [0], [1], [0, 0, 1, 1], [], []>} : vector<1x32xf32>, vector<32x128xf32>, vector<1x128xf32> -> vector<1x128xf32>
    %c0_46 = arith.constant 0 : index
    %c0_47 = arith.constant 0 : index
    %79 = vector.load %arg9[%c0_46, %c0_47] : memref<1x128xf32, #tpu.memory_space<vmem>>, vector<1x128xf32>
    %80 = arith.addf %78, %79 : vector<1x128xf32>
    %c0_48 = arith.constant 0 : index
    %c0_49 = arith.constant 0 : index
    %c0_50 = arith.constant 0 : index
    %81 = vector.load %arg10[%c0_48, %c0_49, %c0_50] : memref<1x1x128xf32, #tpu.memory_space<vmem>>, vector<1x1x128xf32>
    %82 = vector.shape_cast %81 : vector<1x1x128xf32> to vector<1x128xf32>
    %83 = vector.shape_cast %80 : vector<1x128xf32> to vector<1x1x128xf32>
    tpu.vector_store %arg10[%c0_48, %c0_49, %c0_50], %83 {strides = array<i32>} : memref<1x1x128xf32, #tpu.memory_space<vmem>>, vector<1x1x128xf32>,
    %c0_i32_51 = arith.constant 0 : i32
    %84 = arith.cmpi eq, %arg0, %c0_i32_51 : i32
    %85 = arith.extui %84 : i1 to i32
    %c0_i32_52 = arith.constant 0 : i32
    %86 = arith.cmpi ne, %85, %c0_i32_52 : i32
    scf.if %86 {
      %c0_53 = arith.constant 0 : index
      %c0_54 = arith.constant 0 : index
      %c0_55 = arith.constant 0 : index
      %87 = vector.load %arg12[%c0_53, %c0_54, %c0_55] : memref<2x1x32xf32, #tpu.memory_space<vmem>>, vector<1x1x32xf32>
      %88 = vector.shape_cast %87 : vector<1x1x32xf32> to vector<1x32xf32>
      %c1_56 = arith.constant 1 : index
      %c0_57 = arith.constant 0 : index
      %c0_58 = arith.constant 0 : index
      %89 = vector.load %arg12[%c1_56, %c0_57, %c0_58] : memref<2x1x32xf32, #tpu.memory_space<vmem>>, vector<1x1x32xf32>
      %90 = vector.shape_cast %89 : vector<1x1x32xf32> to vector<1x32xf32>
      %c0_59 = arith.constant 0 : index
      %c0_60 = arith.constant 0 : index
      %c0_61 = arith.constant 0 : index
      %91 = vector.load %arg13[%c0_59, %c0_60, %c0_61] : memref<2x1x32xf32, #tpu.memory_space<vmem>>, vector<1x1x32xf32>
      %92 = vector.shape_cast %91 : vector<1x1x32xf32> to vector<1x32xf32>
      %c1_62 = arith.constant 1 : index
      %c0_63 = arith.constant 0 : index
      %c0_64 = arith.constant 0 : index
      %93 = vector.load %arg13[%c1_62, %c0_63, %c0_64] : memref<2x1x32xf32, #tpu.memory_space<vmem>>, vector<1x1x32xf32>
      %94 = vector.shape_cast %93 : vector<1x1x32xf32> to vector<1x32xf32>
      %95 = tpu.concatenate %88, %90, %92, %94 in 1 : vector<1x32xf32>, vector<1x32xf32>, vector<1x32xf32>, vector<1x32xf32> -> vector<1x128xf32>
      %c0_65 = arith.constant 0 : index
      %c0_66 = arith.constant 0 : index
      %96 = vector.load %arg11[%c0_65, %c0_66] : memref<1x128xf32, #tpu.memory_space<vmem>>, vector<1x128xf32>
      tpu.vector_store %arg11[%c0_65, %c0_66], %95 {strides = array<i32>} : memref<1x128xf32, #tpu.memory_space<vmem>>, vector<1x128xf32>,
    } else {
    }
    return
  }
  func.func @transform_0(%arg0: i32, %arg1: memref<1xi32, #tpu.memory_space<smem>>) -> (i32, i32, i32) {
    %c0_i32 = arith.constant 0 : i32
    %c0_i32_0 = arith.constant 0 : i32
    %c0_i32_1 = arith.constant 0 : i32
    %c0_i32_2 = arith.constant 0 : i32
    return %c0_i32, %c0_i32_0, %c0_i32_1 : i32, i32, i32
  }
  func.func @transform_1(%arg0: i32, %arg1: memref<1xi32, #tpu.memory_space<smem>>) -> (i32, i32) {
    %c0_i32 = arith.constant 0 : i32
    %c0_i32_0 = arith.constant 0 : i32
    %c0_i32_1 = arith.constant 0 : i32
    return %c0_i32, %c0_i32_0 : i32, i32
  }
  func.func @transform_2(%arg0: i32, %arg1: memref<1xi32, #tpu.memory_space<smem>>) -> (i32, i32, i32) {
    %c0_i32 = arith.constant 0 : i32
    %c0_i32_0 = arith.constant 0 : i32
    %c0_i32_1 = arith.constant 0 : i32
    %c0_i32_2 = arith.constant 0 : i32
    return %c0_i32, %c0_i32_0, %c0_i32_1 : i32, i32, i32
  }
  func.func @transform_3(%arg0: i32, %arg1: memref<1xi32, #tpu.memory_space<smem>>) -> (i32, i32, i32) {
    %c0_i32 = arith.constant 0 : i32
    %c0_i32_0 = arith.constant 0 : i32
    %c0_i32_1 = arith.constant 0 : i32
    %c0_i32_2 = arith.constant 0 : i32
    return %c0_i32, %c0_i32_0, %c0_i32_1 : i32, i32, i32
  }
  func.func @transform_4(%arg0: i32, %arg1: memref<1xi32, #tpu.memory_space<smem>>) -> (i32, i32, i32) {
    %c0_i32 = arith.constant 0 : i32
    %c0_i32_0 = arith.constant 0 : i32
    %c0_i32_1 = arith.constant 0 : i32
    %c0_i32_2 = arith.constant 0 : i32
    return %c0_i32, %c0_i32_0, %c0_i32_1 : i32, i32, i32
  }
  func.func @transform_5(%arg0: i32, %arg1: memref<1xi32, #tpu.memory_space<smem>>) -> (i32, i32, i32) {
    %c0_i32 = arith.constant 0 : i32
    %c0_i32_0 = arith.constant 0 : i32
    %c0_i32_1 = arith.constant 0 : i32
    %c0_i32_2 = arith.constant 0 : i32
    return %c0_i32, %c0_i32_0, %c0_i32_1 : i32, i32, i32
  }
  func.func @transform_6(%arg0: i32, %arg1: memref<1xi32, #tpu.memory_space<smem>>) -> (i32, i32) {
    %c0_i32 = arith.constant 0 : i32
    %c0_i32_0 = arith.constant 0 : i32
    %c0_i32_1 = arith.constant 0 : i32
    return %c0_i32, %c0_i32_0 : i32, i32
  }
  func.func @transform_7(%arg0: i32, %arg1: memref<1xi32, #tpu.memory_space<smem>>) -> (i32, i32) {
    %c0_i32 = arith.constant 0 : i32
    %c0_i32_0 = arith.constant 0 : i32
    %c0_i32_1 = arith.constant 0 : i32
    return %c0_i32, %c0_i32_0 : i32, i32
  }
  func.func @transform_8(%arg0: i32, %arg1: memref<1xi32, #tpu.memory_space<smem>>) -> (i32, i32, i32) {
    %c0_i32 = arith.constant 0 : i32
    %c0_i32_0 = arith.constant 0 : i32
    %c0_i32_1 = arith.constant 0 : i32
    return %arg0, %c0_i32, %c0_i32_0 : i32, i32, i32
  }
  func.func @transform_9(%arg0: i32, %arg1: memref<1xi32, #tpu.memory_space<smem>>) -> (i32, i32) {
    %c0_i32 = arith.constant 0 : i32
    %c0_i32_0 = arith.constant 0 : i32
    %c0_i32_1 = arith.constant 0 : i32
    return %c0_i32, %c0_i32_0 : i32, i32
  }
}

</mosaic_0001>

<llo_original>
// kernel: tpu_custom_call.1
$region0: #{tpu_custom_call.1}
  #allocation0 [shape = 'u32[]', space=smem, size = 0x4, offset = 0x4, fixed_abs, tag = 'smem constant byte address 0x4 - core index']
  #allocation1 [shape = 'u32[72,128]{1,0:T(1,128)}', space=vmem, size = 0x9000, scoped, tag = 'internal scratch']
  #allocation2 [shape = 'f32[2,1,32]{2,1,0:T(1,128)}', space=vmem, size = 0x400, scoped, tag = 'scratch operand']
  #allocation3 [shape = 'f32[2,1,32]{2,1,0:T(1,128)}', space=vmem, size = 0x400, scoped, tag = 'scratch operand']
  #allocation4 [shape = 's32[1]{0}', space=sflag, size = 0x4, scoped, tag = 'scoped memory for tpu_custom_call.1']
  #allocation5 [shape = 's32[1]{0:T(128)S(6)}', space=smem, size = 0x200, scoped, tag = 'prefetched SMEM operand 0']
  %s0 = inlined_call_operand.<no memory space> [shape: s32[1], index: 0, kind: input, shape index: {}]
  %s1 = inlined_call_operand.vmem [shape: f32[64,1,32], index: 1, kind: input, shape index: {}]
  %s2 = inlined_call_operand.hbm [shape: f32[96,256], index: 2, kind: input, shape index: {}]
  %s3 = inlined_call_operand.vmem [shape: f32[2,32,128], index: 3, kind: input, shape index: {}]
  %s4 = inlined_call_operand.vmem [shape: f32[2,1,128], index: 4, kind: input, shape index: {}]
  %s5 = inlined_call_operand.vmem [shape: f32[2,1,32], index: 5, kind: input, shape index: {}]
  %s6 = inlined_call_operand.hbm [shape: f32[2,1,32], index: 6, kind: input, shape index: {}]
  %s7 = inlined_call_operand.vmem [shape: f32[32,128], index: 7, kind: input, shape index: {}]
  %s8 = inlined_call_operand.vmem [shape: f32[1,128], index: 8, kind: input, shape index: {}]
  %s9 = inlined_call_operand.hbm [shape: f32[1,1,128], index: 9, kind: output, shape index: {0}]
  %s10 = inlined_call_operand.hbm [shape: f32[1,128], index: 10, kind: output, shape index: {1}]
  %11 = xla_tuple %s9, %s10
  %s12 = sld [smem:[#allocation0]]
  $region66: #{tpu_custom_call.1} parent=0
    _
  %s14 = ssub.s32 1, %s12
  %s15 = scalar_select 0, %s14, %s12
  %16 = sst [smem:[#allocation5]] %s0
  $region1: #{tpu_custom_call.1} parent=0
    #allocation6 [shape = 'u8[98304]{0}', space=vmem, size = 0x18000, scoped, tag = 'input window, operand 2, single buffered']
    #allocation7 [shape = 's32[1]{0}', space=sflag, size = 0x4, scoped, tag = 'scoped memory for tpu_custom_call.1']
    #allocation8 [shape = 's32[1]{0}', space=sflag, size = 0x4, scoped, tag = 'scoped memory for tpu_custom_call.1']
    #allocation9 [shape = 'u8[1024]{0}', space=vmem, size = 0x400, scoped, tag = 'input window, operand 6, single buffered']
    #allocation10 [shape = 's32[1]{0}', space=sflag, size = 0x4, scoped, tag = 'scoped memory for tpu_custom_call.1']
    #allocation11 [shape = 'u8[512]{0}', space=vmem, size = 0x400, scoped, tag = 'output window, operand 0, single buffered']
    #allocation12 [shape = 'u8[512]{0}', space=vmem, size = 0x400, scoped, tag = 'output window, operand 1, single buffered']
    #allocation13 [shape = 's32[1]{0}', space=sflag, size = 0x4, scoped, tag = 'scoped memory for tpu_custom_call.1']
    %17 = vsyncpa [#allocation7], 0
    %18 = vsyncpa [#allocation10], 0
    %19 = vsyncpa [#allocation8], 0
    %20 = vsyncpa [#allocation13], 0
    // Predicated region
    $region2: #{tpu_custom_call.1} parent=1 // pred_check
      _
    $region3: #{tpu_custom_call.1} parent=1 // pred_check_branch
      %22 = sbr.rel (0) target = $region5
    $region4: #{tpu_custom_call.1} parent=1 // pred_region
      _
    $region5: #{tpu_custom_call.1} parent=1 // pred_fallthru
      _
    // Predicated region
    $region6: #{tpu_custom_call.1} parent=1 // pred_check
      _
    $region7: #{tpu_custom_call.1} parent=1 // pred_check_branch
      %24 = sbr.rel (0) target = $region9
    $region8: #{tpu_custom_call.1} parent=1 // pred_region
      %26 = vsyncadd [#allocation7], 0
      %s27 = sshll.u32 %s2, 4
      %s28 = int_to_ptr.hbm [resolvable:$true] %s27
      %s29 = sshll.u32 [#allocation6], 4
      %s30 = int_to_ptr.vmem [resolvable:$true] %s29
      %35 = dma.hbm_to_vmem [thread:$0]  %s28, 3072, %s30, [#allocation7], 256, 256, 16
    $region9: #{tpu_custom_call.1} parent=1 // pred_fallthru
      _
    // Predicated region
    $region10: #{tpu_custom_call.1} parent=1 // pred_check
      _
    $region11: #{tpu_custom_call.1} parent=1 // pred_check_branch
      %37 = sbr.rel (0) target = $region13
    $region12: #{tpu_custom_call.1} parent=1 // pred_region
      _
    $region13: #{tpu_custom_call.1} parent=1 // pred_fallthru
      _
    // Predicated region
    $region14: #{tpu_custom_call.1} parent=1 // pred_check
      _
    $region15: #{tpu_custom_call.1} parent=1 // pred_check_branch
      %39 = sbr.rel (0) target = $region17
    $region16: #{tpu_custom_call.1} parent=1 // pred_region
      _
    $region17: #{tpu_custom_call.1} parent=1 // pred_fallthru
      _
    // Predicated region
    $region18: #{tpu_custom_call.1} parent=1 // pred_check
      _
    $region19: #{tpu_custom_call.1} parent=1 // pred_check_branch
      %41 = sbr.rel (0) target = $region21
    $region20: #{tpu_custom_call.1} parent=1 // pred_region
      _
    $region21: #{tpu_custom_call.1} parent=1 // pred_fallthru
      _
    // Predicated region
    $region22: #{tpu_custom_call.1} parent=1 // pred_check
      _
    $region23: #{tpu_custom_call.1} parent=1 // pred_check_branch
      %43 = sbr.rel (0) target = $region25
    $region24: #{tpu_custom_call.1} parent=1 // pred_region
      %45 = vsyncadd [#allocation10], 0
      %s46 = sshll.u32 %s6, 4
      %s47 = int_to_ptr.hbm [resolvable:$true] %s46
      %s48 = sshll.u32 [#allocation9], 4
      %s49 = int_to_ptr.vmem [resolvable:$true] %s48
      %54 = dma.hbm_to_vmem [thread:$0]  %s47, 32, %s49, [#allocation10], 16, 16, 1
    $region25: #{tpu_custom_call.1} parent=1 // pred_fallthru
      _
    // Predicated region
    $region26: #{tpu_custom_call.1} parent=1 // pred_check
      _
    $region27: #{tpu_custom_call.1} parent=1 // pred_check_branch
      %56 = sbr.rel (0) target = $region29
    $region28: #{tpu_custom_call.1} parent=1 // pred_region
      _
    $region29: #{tpu_custom_call.1} parent=1 // pred_fallthru
      _
    // Predicated region
    $region30: #{tpu_custom_call.1} parent=1 // pred_check
      _
    $region31: #{tpu_custom_call.1} parent=1 // pred_check_branch
      %58 = sbr.rel (0) target = $region33
    $region32: #{tpu_custom_call.1} parent=1 // pred_region
      _
    $region33: #{tpu_custom_call.1} parent=1 // pred_fallthru
      _
    // Predicated region
    $region34: #{tpu_custom_call.1} parent=1 // pred_check
      _
    $region35: #{tpu_custom_call.1} parent=1 // pred_check_branch
      %60 = sbr.rel (0) target = $region37
    $region36: #{tpu_custom_call.1} parent=1 // pred_region
      %62 = dma.done [#allocation7], 3072
    $region37: #{tpu_custom_call.1} parent=1 // pred_fallthru
      _
    // Predicated region
    $region38: #{tpu_custom_call.1} parent=1 // pred_check
      _
    $region39: #{tpu_custom_call.1} parent=1 // pred_check_branch
      %64 = sbr.rel (0) target = $region41
    $region40: #{tpu_custom_call.1} parent=1 // pred_region
      %66 = dma.done [#allocation10], 32
    $region41: #{tpu_custom_call.1} parent=1 // pred_fallthru
      _
    %p67 = scmp.eq.s32.totalorder 0, 0
    // Predicated region
    $region42: #{tpu_custom_call.1} parent=1 // pred_check
      %p68 = pneg %p67
    $region43: #{tpu_custom_call.1} parent=1 // pred_check_branch
      %70 = sbr.rel (%p68) target = $region45
    $region44: #{tpu_custom_call.1} parent=1 // pred_region
      %v71 = vld [vmem:[%s5] sm:$0x1]
      %v72 = vld [vmem:[%s5 + $0x1] sm:$0x1]
      %vm73 = vcmask 253952
      %74 = vst.msk [vmem:[#allocation2] sm:$0x1] %vm73, %v71
      %75 = vst.msk [vmem:[#allocation2 + $0x1] sm:$0x1] %vm73, %v72
      %v76 = vld [vmem:[#allocation9] sm:$0x1]
      %v77 = vld [vmem:[#allocation9 + $0x1] sm:$0x1]
      %78 = vst.msk [vmem:[#allocation3] sm:$0x1] %vm73, %v76
      %79 = vst.msk [vmem:[#allocation3 + $0x1] sm:$0x1] %vm73, %v77
    $region45: #{tpu_custom_call.1} parent=1 // pred_fallthru
      _
    %s80 = sld [smem:[#allocation5]]
    %s81 = scalar_lea.vmem %s1, %s80
    %v82 = vld [vmem:[%s81] sm:$0x1]
    %v83 = vld [vmem:[#allocation2] sm:$0x1]
    %s84 = scalar_lea.vmem [#allocation2], 1
    %v85 = vld [vmem:[%s84] sm:$0x1]
    %v87 = vperm.slane %v83, 0
    %88 = vrot.lane.b32.xlu0 %v87, 32
    %v89 = vpop.permute.xlu0 %88
    %v92 = vperm.slane %v85, 0
    %93 = vrot.lane.b32.xlu0 %v92, 64
    %v94 = vpop.permute.xlu0 %93
    %vm96 = vcmask 261120
    %v97 = vsel %vm96, %v82, %v89
    %vm98 = vcmask 523264
    %v99 = vsel %vm98, %v97, %v94
    %v100 = vld [vmem:[#allocation6] sm:$0xff]
    %v101 = vld [vmem:[#allocation6 + $0x8] sm:$0xff]
    %v102 = vld [vmem:[#allocation6 + $0x10] sm:$0xff]
    %v103 = vld [vmem:[#allocation6 + $0x18] sm:$0xff]
    %v104 = vld [vmem:[#allocation6 + $0x20] sm:$0xff]
    %v105 = vld [vmem:[#allocation6 + $0x28] sm:$0xff]
    %v106 = vld [vmem:[#allocation6 + $0x30] sm:$0xff]
    %v107 = vld [vmem:[#allocation6 + $0x38] sm:$0xff]
    %v108 = vld [vmem:[#allocation6 + $0x40] sm:$0xff]
    %v109 = vld [vmem:[#allocation6 + $0x48] sm:$0xff]
    %v110 = vld [vmem:[#allocation6 + $0x50] sm:$0xff]
    %v111 = vld [vmem:[#allocation6 + $0x58] sm:$0xff]
    %v112 = vld [vmem:[#allocation6 + $0x60] sm:$0xff]
    %v113 = vld [vmem:[#allocation6 + $0x68] sm:$0xff]
    %v114 = vld [vmem:[#allocation6 + $0x70] sm:$0xff]
    %v115 = vld [vmem:[#allocation6 + $0x78] sm:$0xff]
    %v116 = vld [vmem:[#allocation6 + $0x80] sm:$0xff]
    %v117 = vld [vmem:[#allocation6 + $0x88] sm:$0xff]
    %v118 = vld [vmem:[#allocation6 + $0x90] sm:$0xff]
    %v119 = vld [vmem:[#allocation6 + $0x98] sm:$0xff]
    %v120 = vld [vmem:[#allocation6 + $0xa0] sm:$0xff]
    %v121 = vld [vmem:[#allocation6 + $0xa8] sm:$0xff]
    %v122 = vld [vmem:[#allocation6 + $0xb0] sm:$0xff]
    %v123 = vld [vmem:[#allocation6 + $0xb8] sm:$0xff]
    %vm124 = vcmask 785408
    %v126 = vsel %vm124, %v99, 0
    %128 = vmatpush.msra.mxu0 0.0
    %129 = vmatpush.msra.mxu0 0.0
    %130 = vmatpush.msra.mxu0 0.0
    %131 = vmatpush.msra.mxu0 0.0
    %132 = vmatpush.msra.mxu0 %v122
    %133 = vmatpush.msra.mxu0 %v120
    %134 = vmatpush.msra.mxu0 %v118
    %135 = vmatpush.msra.mxu0 %v116
    %136 = vmatpush.msra.mxu0 %v114
    %137 = vmatpush.msra.mxu0 %v112
    %138 = vmatpush.msra.mxu0 %v110
    %139 = vmatpush.msra.mxu0 %v108
    %140 = vmatpush.msra.mxu0 %v106
    %141 = vmatpush.msra.mxu0 %v104
    %142 = vmatpush.msra.mxu0 %v102
    %143 = vmatpush.msra.mxu0 %v100
    %144 = vmatmul.f32.gmra.mxu0 %v126
    %v145 = vpop.f32.mrf.mxu0
    %v146 = vadd.f32 0.0, %v145
    %147 = vdwg.mxu0
    %148 = vmatpush.msra.mxu0 0.0
    %149 = vmatpush.msra.mxu0 0.0
    %150 = vmatpush.msra.mxu0 0.0
    %151 = vmatpush.msra.mxu0 0.0
    %152 = vmatpush.msra.mxu0 %v123
    %153 = vmatpush.msra.mxu0 %v121
    %154 = vmatpush.msra.mxu0 %v119
    %155 = vmatpush.msra.mxu0 %v117
    %156 = vmatpush.msra.mxu0 %v115
    %157 = vmatpush.msra.mxu0 %v113
    %158 = vmatpush.msra.mxu0 %v111
    %159 = vmatpush.msra.mxu0 %v109
    %160 = vmatpush.msra.mxu0 %v107
    %161 = vmatpush.msra.mxu0 %v105
    %162 = vmatpush.msra.mxu0 %v103
    %163 = vmatpush.msra.mxu0 %v101
    %164 = vmatmul.f32.gmra.mxu0 %v126
    %v165 = vpop.f32.mrf.mxu0
    %v166 = vadd.f32 0.0, %v165
    %167 = vdwg.mxu0
    %v168 = vld [vmem:[%s4] sm:$0x1]
    %v169 = vadd.f32 %v146, %v168
    %v170 = vld [vmem:[#allocation3] sm:$0x1]
    %v171 = vmul.f32 %v169, 0.5
    %v172 = vtanh.pop %v171
    %v173 = vmul.f32 %v172, 0.5
    %v174 = vadd.f32 %v173, 0.5
    %v175 = vtanh.pop %v169
    %v177 = vperm.slane %v170, 0
    %178 = vrot.lane.b32.xlu0 %v177, 32
    %v179 = vpop.permute.xlu0 %178
    %v181 = vmul.f32 %v174, %v179
    %183 = vrot.lane.b32.xlu0 %v175, 64
    %v184 = vpop.permute.xlu0 %183
    %v186 = vmul.f32 %v174, %v184
    %188 = vrot.lane.b32.xlu0 %v186, 32
    %v189 = vpop.permute.xlu0 %188
    %v191 = vadd.f32 %v181, %v189
    %v192 = vtanh.pop %v191
    %194 = vrot.lane.b32.xlu0 %v192, 64
    %v195 = vpop.permute.xlu0 %194
    %v197 = vmul.f32 %v174, %v195
    %199 = vrot.lane.b32.xlu0 %v197, 32
    %v200 = vpop.permute.xlu0 %199
    %vm202 = vcmask 253952
    %203 = vst.msk [vmem:[#allocation2] sm:$0x1] %vm202, %v200
    %205 = vrot.lane.b32.xlu0 %v191, 96
    %v206 = vpop.permute.xlu0 %205
    %208 = vst.msk [vmem:[#allocation3] sm:$0x1] %vm202, %v206
    %s209 = scalar_lea.vmem %s4, 1
    %v210 = vld [vmem:[%s209] sm:$0x1]
    %v211 = vadd.f32 %v166, %v210
    %s212 = scalar_lea.vmem %s3, 32
    %v213 = vld [vmem:[%s212] sm:$0xff]
    %v214 = vld [vmem:[%s212 + $0x8] sm:$0xff]
    %v215 = vld [vmem:[%s212 + $0x10] sm:$0xff]
    %v216 = vld [vmem:[%s212 + $0x18] sm:$0xff]
    %v217 = vsel %vm96, %v200, 0
    %219 = vmatpush.msra.mxu0 0.0
    %220 = vmatpush.msra.mxu0 0.0
    %221 = vmatpush.msra.mxu0 0.0
    %222 = vmatpush.msra.mxu0 0.0
    %223 = vmatpush.msra.mxu0 0.0
    %224 = vmatpush.msra.mxu0 0.0
    %225 = vmatpush.msra.mxu0 0.0
    %226 = vmatpush.msra.mxu0 0.0
    %227 = vmatpush.msra.mxu0 0.0
    %228 = vmatpush.msra.mxu0 0.0
    %229 = vmatpush.msra.mxu0 0.0
    %230 = vmatpush.msra.mxu0 0.0
    %231 = vmatpush.msra.mxu0 %v216
    %232 = vmatpush.msra.mxu0 %v215
    %233 = vmatpush.msra.mxu0 %v214
    %234 = vmatpush.msra.mxu0 %v213
    %235 = vmatmul.f32.gmra.mxu0 %v217
    %v236 = vpop.f32.mrf.mxu0
    %v237 = vadd.f32 0.0, %v236
    %238 = vdwg.mxu0
    %v239 = vadd.f32 %v211, %v237
    %s240 = scalar_lea.vmem [#allocation3], 1
    %v241 = vld [vmem:[%s240] sm:$0x1]
    %v242 = vmul.f32 %v239, 0.5
    %v243 = vtanh.pop %v242
    %v244 = vmul.f32 %v243, 0.5
    %v245 = vadd.f32 %v244, 0.5
    %v246 = vtanh.pop %v239
    %v248 = vperm.slane %v241, 0
    %249 = vrot.lane.b32.xlu0 %v248, 32
    %v250 = vpop.permute.xlu0 %249
    %v252 = vmul.f32 %v245, %v250
    %254 = vrot.lane.b32.xlu0 %v246, 64
    %v255 = vpop.permute.xlu0 %254
    %v257 = vmul.f32 %v245, %v255
    %259 = vrot.lane.b32.xlu0 %v257, 32
    %v260 = vpop.permute.xlu0 %259
    %v262 = vadd.f32 %v252, %v260
    %v263 = vtanh.pop %v262
    %265 = vrot.lane.b32.xlu0 %v263, 64
    %v266 = vpop.permute.xlu0 %265
    %v268 = vmul.f32 %v245, %v266
    %270 = vrot.lane.b32.xlu0 %v268, 32
    %v271 = vpop.permute.xlu0 %270
    %273 = vst.msk [vmem:[%s84] sm:$0x1] %vm202, %v271
    %275 = vrot.lane.b32.xlu0 %v262, 96
    %v276 = vpop.permute.xlu0 %275
    %278 = vst.msk [vmem:[%s240] sm:$0x1] %vm202, %v276
    %v279 = vld [vmem:[%s7] sm:$0xff]
    %v280 = vld [vmem:[%s7 + $0x8] sm:$0xff]
    %v281 = vld [vmem:[%s7 + $0x10] sm:$0xff]
    %v282 = vld [vmem:[%s7 + $0x18] sm:$0xff]
    %v283 = vld [vmem:[%s8] sm:$0x1]
    %v284 = vsel %vm96, %v271, 0
    %286 = vmatpush.msra.mxu0 0.0
    %287 = vmatpush.msra.mxu0 0.0
    %288 = vmatpush.msra.mxu0 0.0
    %289 = vmatpush.msra.mxu0 0.0
    %290 = vmatpush.msra.mxu0 0.0
    %291 = vmatpush.msra.mxu0 0.0
    %292 = vmatpush.msra.mxu0 0.0
    %293 = vmatpush.msra.mxu0 0.0
    %294 = vmatpush.msra.mxu0 0.0
    %295 = vmatpush.msra.mxu0 0.0
    %296 = vmatpush.msra.mxu0 0.0
    %297 = vmatpush.msra.mxu0 0.0
    %298 = vmatpush.msra.mxu0 %v282
    %299 = vmatpush.msra.mxu0 %v281
    %300 = vmatpush.msra.mxu0 %v280
    %301 = vmatpush.msra.mxu0 %v279
    %302 = vmatmul.f32.gmra.mxu0 %v284
    %v303 = vpop.f32.mrf.mxu0
    %v304 = vadd.f32 %v283, %v303
    %305 = vdwg.mxu0
    %306 = vst [vmem:[#allocation11] sm:$0x1] %v304
    // Predicated region
    $region46: #{tpu_custom_call.1} parent=1 // pred_check
      %p307 = pneg %p67
    $region47: #{tpu_custom_call.1} parent=1 // pred_check_branch
      %309 = sbr.rel (%p307) target = $region49
    $region48: #{tpu_custom_call.1} parent=1 // pred_region
      %v310 = vld [vmem:[#allocation2] sm:$0x1]
      %v311 = vld [vmem:[%s84] sm:$0x1]
      %v312 = vld [vmem:[#allocation3] sm:$0x1]
      %v313 = vld [vmem:[%s240] sm:$0x1]
      %v315 = vperm.slane %v311, 0
      %316 = vrot.lane.b32.xlu0 %v315, 32
      %v317 = vpop.permute.xlu0 %316
      %v320 = vperm.slane %v312, 0
      %321 = vrot.lane.b32.xlu0 %v320, 64
      %v322 = vpop.permute.xlu0 %321
      %v325 = vperm.slane %v313, 0
      %326 = vrot.lane.b32.xlu0 %v325, 96
      %v327 = vpop.permute.xlu0 %326
      %v329 = vsel %vm96, %v310, %v317
      %v330 = vsel %vm98, %v329, %v322
      %v331 = vsel %vm124, %v330, %v327
      %332 = vst [vmem:[#allocation12] sm:$0x1] %v331
    $region49: #{tpu_custom_call.1} parent=1 // pred_fallthru
      _
    // Predicated region
    $region50: #{tpu_custom_call.1} parent=1 // pred_check
      _
    $region51: #{tpu_custom_call.1} parent=1 // pred_check_branch
      %334 = sbr.rel (0) target = $region53
    $region52: #{tpu_custom_call.1} parent=1 // pred_region
      %336 = vsyncadd [#allocation8], 0
      %s338 = sshll.u32 [#allocation11], 4
      %s339 = int_to_ptr.vmem [resolvable:$true] %s338
      %s340 = sshll.u32 %s9, 4
      %s341 = int_to_ptr.hbm [resolvable:$true] %s340
      %343 = dma.vmem_to_hbm [thread:$0]  %s339, 16, %s341, [#allocation8]
    $region53: #{tpu_custom_call.1} parent=1 // pred_fallthru
      _
    // Predicated region
    $region54: #{tpu_custom_call.1} parent=1 // pred_check
      _
    $region55: #{tpu_custom_call.1} parent=1 // pred_check_branch
      %345 = sbr.rel (0) target = $region57
    $region56: #{tpu_custom_call.1} parent=1 // pred_region
      %347 = vsyncadd [#allocation13], 0
      %s349 = sshll.u32 [#allocation12], 4
      %s350 = int_to_ptr.vmem [resolvable:$true] %s349
      %s351 = sshll.u32 %s10, 4
      %s352 = int_to_ptr.hbm [resolvable:$true] %s351
      %354 = dma.vmem_to_hbm [thread:$0]  %s350, 16, %s352, [#allocation13]
    $region57: #{tpu_custom_call.1} parent=1 // pred_fallthru
      _
    // Predicated region
    $region58: #{tpu_custom_call.1} parent=1 // pred_check
      _
    $region59: #{tpu_custom_call.1} parent=1 // pred_check_branch
      %356 = sbr.rel (0) target = $region61
    $region60: #{tpu_custom_call.1} parent=1 // pred_region
      %358 = dma.done [#allocation8], 16
    $region61: #{tpu_custom_call.1} parent=1 // pred_fallthru
      _
    // Predicated region
    $region62: #{tpu_custom_call.1} parent=1 // pred_check
      _
    $region63: #{tpu_custom_call.1} parent=1 // pred_check_branch
      %360 = sbr.rel (0) target = $region65
    $region64: #{tpu_custom_call.1} parent=1 // pred_region
      %362 = dma.done [#allocation13], 16
    $region65: #{tpu_custom_call.1} parent=1 // pred_fallthru
      _
    %363 = vsyncpa [#allocation7], 1
    %364 = vsyncpa [#allocation10], 1
    %365 = vsyncpa [#allocation8], 1
    %366 = vsyncpa [#allocation13], 1

</llo_original>
